<compile_context>
chip_gen: v5e
topology: v5e:2x2
jax: 0.10.0
libtpu: 0.0.40
codegen_flags: <defaults>
</compile_context>

<pallas_src>
import jax
import jax.numpy as jnp
from jax.experimental import pallas as pl
from jax.experimental.pallas import tpu as pltpu


def _linear_kernel(x_ref, w_ref, b_ref, o_ref):
    # x_ref: (bt, D)   w_ref: (D, C)   b_ref: (1, C)   o_ref: (bt, C)
    acc = jnp.dot(x_ref[...], w_ref[...], preferred_element_type=jnp.float32)
    o_ref[...] = (acc + b_ref[...].astype(jnp.float32)).astype(o_ref.dtype)


def _round_up(n, m):
    return ((n + m - 1) // m) * m


def prepare_params(weight, bias):
    """One-time layout transform of PyTorch nn.Linear params.

    weight: (C, D) PyTorch layout -> (D, C) kernel layout
    bias:   (C,)                  -> (1, C)
    Call once at init; do NOT redo this on every forward call.
    """
    w_t = jnp.transpose(weight, (1, 0))
    b2 = bias.reshape(1, -1)
    return w_t, b2


def linear_classifier(x, w_t, b2, *, b_tile=1024,
                      vmem_budget_bytes=40 * 1024 * 1024):
    """Pallas forward pass of nn.Linear (logits = x @ w_t + b2).

    x:   (B, D) input (any MXU-supported dtype; bf16 halves HBM traffic)
    w_t: (D, C) weight, pre-transposed by prepare_params
    b2:  (1, C) bias
    returns (B, C) logits in x.dtype (f32 accumulation inside the kernel)
    """
    B, D = x.shape
    D_w, C = w_t.shape
    assert D_w == D, "weight / input feature-dim mismatch"
    assert b2.shape == (1, C)

    xb = jnp.dtype(x.dtype).itemsize
    wb = jnp.dtype(w_t.dtype).itemsize
    lane = 128

    # VMEM accounting with lane padding (D and C pad up to 128 lanes in VMEM).
    Dp, Cp = _round_up(D, lane), _round_up(C, lane)
    per_row = 2 * Dp * xb + 2 * Cp * xb            # double-buffered x tile + out tile
    w_bytes = 2 * _round_up(D, 8) * Cp * wb        # resident weight (budget 2 bufs)
    b_bytes = 2 * 8 * Cp * wb
    avail = max(vmem_budget_bytes - w_bytes - b_bytes, 8 * per_row)
    bt_vmem = max(8, (avail // per_row) // 8 * 8)

    # Batch tile: as large as the budget allows, but keep >= 2 grid steps when
    # B > 8 so the "parallel" axis can shard across both v7x TensorCores.
    if B <= 8:
        bt = B                                      # single full-extent block
    else:
        bt = min(b_tile, bt_vmem, _round_up(B, 8))  # all multiples of 8
        bt = min(bt, _round_up(pl.cdiv(B, 2), 8))
        bt = max(8, bt)

    grid = (pl.cdiv(B, bt),)

    footprint = bt * per_row + w_bytes + b_bytes
    vmem_limit = int(min(48 * 1024 * 1024, max(footprint + (4 << 20), 16 << 20)))

    # NOTE: if input_dim ever grows so large that 2*bt*round_up(D,128)*itemsize
    # no longer fits the budget at a bandwidth-efficient bt, add a trailing
    # "arbitrary" K grid axis with an f32 VMEM accumulator (pl.when init /
    # finalize) instead of shrinking bt. Not needed at WESAD feature sizes.
    return pl.pallas_call(
        _linear_kernel,
        out_shape=jax.ShapeDtypeStruct((B, C), x.dtype),
        grid=grid,
        in_specs=[
            pl.BlockSpec((bt, D), lambda i: (i, 0)),   # batch-tiled, lane-dense in D
            pl.BlockSpec((D, C), lambda i: (0, 0)),    # full weight, resident
            pl.BlockSpec((1, C), lambda i: (0, 0)),    # bias, resident
        ],
        out_specs=pl.BlockSpec((bt, C), lambda i: (i, 0)),
        compiler_params=pltpu.CompilerParams(
            dimension_semantics=("parallel",),
            vmem_limit_bytes=vmem_limit),
    )(x, w_t, b2)


def init_params(key, input_dim, num_classes=1):
    kw, kb = jax.random.split(key)
    bound = 1.0 / float(input_dim) ** 0.5           # PyTorch nn.Linear default init
    weight = jax.random.uniform(kw, (num_classes, input_dim), jnp.float32,
                                minval=-bound, maxval=bound)
    bias = jax.random.uniform(kb, (num_classes,), jnp.float32,
                              minval=-bound, maxval=bound)
    return weight, bias


if __name__ == "__main__":
    key = jax.random.PRNGKey(0)
    kx, kp = jax.random.split(key)

    B, D, C = 2, 32, 1                              # (batch, input_dim, num_classes)
    x = jax.random.normal(kx, (B, D), jnp.float32)
    weight, bias = init_params(kp, D, C)            # PyTorch (C, D) / (C,) layout

    w_t, b2 = prepare_params(weight, bias)          # one-time layout transform
    y = linear_classifier(x, w_t, b2)
    jax.block_until_ready(y)
    assert y.shape == (B, C)

    # Reference check against plain XLA.
    y_ref = x @ weight.T + bias
    assert jnp.allclose(y, y_ref, atol=1e-5, rtol=1e-5)

    print("KERNEL_OK")
</pallas_src>

<mosaic_0001>
module attributes {stable_mosaic.version = 11 : i64} {
  func.func @_linear_kernel(%arg0: i32, %arg1: memref<2x32xf32, #tpu.memory_space<vmem>>, %arg2: memref<32x1xf32, #tpu.memory_space<vmem>>, %arg3: memref<1x1xf32, #tpu.memory_space<vmem>>, %arg4: memref<2x1xf32, #tpu.memory_space<vmem>>) attributes {dimension_semantics = [#tpu.dimension_semantics<parallel>], iteration_bounds = array<i64: 1>, scalar_prefetch = 0 : i64, scratch_operands = 0 : i64, tpu.core_type = #tpu.core_type<tc>, window_params = [{transform_indices = @transform_0, window_bounds = array<i64: 2, 32>}, {pipeline_mode = #tpu.pipeline_mode<synchronous>, transform_indices = @transform_1, window_bounds = array<i64: 32, 1>}, {pipeline_mode = #tpu.pipeline_mode<synchronous>, transform_indices = @transform_2, window_bounds = array<i64: 1, 1>}, {transform_indices = @transform_3, window_bounds = array<i64: 2, 1>}]} {
    %c0 = arith.constant 0 : index
    %c0_0 = arith.constant 0 : index
    %0 = vector.load %arg1[%c0, %c0_0] : memref<2x32xf32, #tpu.memory_space<vmem>>, vector<2x32xf32>
    %c0_1 = arith.constant 0 : index
    %c0_2 = arith.constant 0 : index
    %1 = vector.load %arg2[%c0_1, %c0_2] : memref<32x1xf32, #tpu.memory_space<vmem>>, vector<32x1xf32>
    %cst = arith.constant dense<0.000000e+00> : vector<2x1xf32>
    %2 = tpu.matmul %0, %1, %cst {dimension_numbers = #tpu.dot_dimension_numbers<[1], [0], [0], [1], [0, 0, 1, 1], [], []>} : vector<2x32xf32>, vector<32x1xf32>, vector<2x1xf32> -> vector<2x1xf32>
    %c0_3 = arith.constant 0 : index
    %c0_4 = arith.constant 0 : index
    %3 = vector.load %arg3[%c0_3, %c0_4] : memref<1x1xf32, #tpu.memory_space<vmem>>, vector<1x1xf32>
    %4 = vector.broadcast %3 : vector<1x1xf32> to vector<2x1xf32>
    %5 = arith.addf %2, %4 : vector<2x1xf32>
    %c0_5 = arith.constant 0 : index
    %c0_6 = arith.constant 0 : index
    %6 = vector.load %arg4[%c0_5, %c0_6] : memref<2x1xf32, #tpu.memory_space<vmem>>, vector<2x1xf32>
    tpu.vector_store %arg4[%c0_5, %c0_6], %5 {strides = array<i32>} : memref<2x1xf32, #tpu.memory_space<vmem>>, vector<2x1xf32>,
    return
  }
  func.func @transform_0(%arg0: i32) -> (i32, i32) {
    %c0_i32 = arith.constant 0 : i32
    %c0_i32_0 = arith.constant 0 : i32
    return %arg0, %c0_i32 : i32, i32
  }
  func.func @transform_1(%arg0: i32) -> (i32, i32) {
    %c0_i32 = arith.constant 0 : i32
    %c0_i32_0 = arith.constant 0 : i32
    %c0_i32_1 = arith.constant 0 : i32
    return %c0_i32, %c0_i32_0 : i32, i32
  }
  func.func @transform_2(%arg0: i32) -> (i32, i32) {
    %c0_i32 = arith.constant 0 : i32
    %c0_i32_0 = arith.constant 0 : i32
    %c0_i32_1 = arith.constant 0 : i32
    return %c0_i32, %c0_i32_0 : i32, i32
  }
  func.func @transform_3(%arg0: i32) -> (i32, i32) {
    %c0_i32 = arith.constant 0 : i32
    %c0_i32_0 = arith.constant 0 : i32
    return %arg0, %c0_i32 : i32, i32
  }
}

</mosaic_0001>

<llo_original>
// kernel: tpu_custom_call.1
$region0: #{tpu_custom_call.1}
  #allocation0 [shape = 'u32[]', space=smem, size = 0x4, offset = 0x4, fixed_abs, tag = 'smem constant byte address 0x4 - core index']
  #allocation1 [shape = 'u32[72,128]{1,0:T(1,128)}', space=vmem, size = 0x9000, scoped, tag = 'internal scratch']
  #allocation2 [shape = 'f32[1,1]{1,0:T(1,128)S(1)}', space=vmem, size = 0x200, scoped, tag = 'scoped memory for tpu_custom_call.1']
  %s0 = inlined_call_operand.vmem [shape: f32[2,32], index: 0, kind: input, shape index: {}]
  %s1 = inlined_call_operand.vmem [shape: f32[32,1], index: 1, kind: input, shape index: {}]
  %s2 = inlined_call_operand.<no memory space> [shape: f32[1,1], index: 2, kind: input, shape index: {}]
  %s3 = inlined_call_operand.vmem [shape: f32[2,1], index: 3, kind: output, shape index: {}]
  %s4 = sld [smem:[#allocation0]]
  $region22: #{tpu_custom_call.1} parent=0
    _
  %s6 = ssub.s32 1, %s4
  %s7 = scalar_select 0, %s6, %s4
  %v8 = vstv %s2
  %9 = vst [vmem:[#allocation2] sm:$0x1] %v8
  // Predicated region
  $region2: #{tpu_custom_call.1} parent=0 // pred_check
    _
  $region3: #{tpu_custom_call.1} parent=0 // pred_check_branch
    %11 = sbr.rel (0) target = $region5
  $region4: #{tpu_custom_call.1} parent=0 // pred_region
    _
  $region5: #{tpu_custom_call.1} parent=0 // pred_fallthru
    _
  // Predicated region
  $region6: #{tpu_custom_call.1} parent=0 // pred_check
    _
  $region7: #{tpu_custom_call.1} parent=0 // pred_check_branch
    %13 = sbr.rel (0) target = $region9
  $region8: #{tpu_custom_call.1} parent=0 // pred_region
    _
  $region9: #{tpu_custom_call.1} parent=0 // pred_fallthru
    _
  // Predicated region
  $region10: #{tpu_custom_call.1} parent=0 // pred_check
    _
  $region11: #{tpu_custom_call.1} parent=0 // pred_check_branch
    %15 = sbr.rel (0) target = $region13
  $region12: #{tpu_custom_call.1} parent=0 // pred_region
    _
  $region13: #{tpu_custom_call.1} parent=0 // pred_fallthru
    _
  %v16 = vld [vmem:[%s0] sm:$0x3]
  %v17 = vld [vmem:[%s1] sm:$0xff]
  %v18 = vld [vmem:[%s1 + $0x8] sm:$0xff]
  %v19 = vld [vmem:[%s1 + $0x10] sm:$0xff]
  %v20 = vld [vmem:[%s1 + $0x18] sm:$0xff]
  %v21 = vld [vmem:[#allocation2] sm:$0x1]
  %v23 = vperm.slane %v21, 0
  %vm25 = vcmask 261120
  %v27 = vsel %vm25, %v16, 0
  %29 = vmatpush.msra.mxu0 0.0
  %30 = vmatpush.msra.mxu0 0.0
  %31 = vmatpush.msra.mxu0 0.0
  %32 = vmatpush.msra.mxu0 0.0
  %33 = vmatpush.msra.mxu0 0.0
  %34 = vmatpush.msra.mxu0 0.0
  %35 = vmatpush.msra.mxu0 0.0
  %36 = vmatpush.msra.mxu0 0.0
  %37 = vmatpush.msra.mxu0 0.0
  %38 = vmatpush.msra.mxu0 0.0
  %39 = vmatpush.msra.mxu0 0.0
  %40 = vmatpush.msra.mxu0 0.0
  %41 = vmatpush.msra.mxu0 %v20
  %42 = vmatpush.msra.mxu0 %v19
  %43 = vmatpush.msra.mxu0 %v18
  %44 = vmatpush.msra.mxu0 %v17
  %45 = vmatmul.f32.gmra.mxu0 %v27
  %v46 = vpop.f32.mrf.mxu0
  %v47 = vadd.f32 %v23, %v46
  %48 = vdwg.mxu0
  %vm49 = vcmask 1024
  %50 = vst.msk [vmem:[%s3] sm:$0x3] %vm49, %v47
  // Predicated region
  $region14: #{tpu_custom_call.1} parent=0 // pred_check
    _
  $region15: #{tpu_custom_call.1} parent=0 // pred_check_branch
    %52 = sbr.rel (0) target = $region17
  $region16: #{tpu_custom_call.1} parent=0 // pred_region
    _
  $region17: #{tpu_custom_call.1} parent=0 // pred_fallthru
    _
  // Predicated region
  $region18: #{tpu_custom_call.1} parent=0 // pred_check
    _
  $region19: #{tpu_custom_call.1} parent=0 // pred_check_branch
    %54 = sbr.rel (0) target = $region21
  $region20: #{tpu_custom_call.1} parent=0 // pred_region
    _
  $region21: #{tpu_custom_call.1} parent=0 // pred_fallthru
    _

</llo_original>
